<compile_context>
chip_gen: v7x
topology: tpu7x:2x2x1
jax: 0.10.0
libtpu: 0.0.40
codegen_flags: <defaults>
</compile_context>

<pallas_src>
import jax
import jax.numpy as jnp
from jax.experimental import pallas as pl
from jax.experimental.pallas import tpu as pltpu

embedding_dim = 10

corpus = ['The cat sits on the mat.', 'The dog sits on the mat.',
          'The cat chases the mouse.', 'The dog chases the ball.',
          'A cat and a dog play together.', 'The mat is under the cat.',
          'The ball rolls under the table.', 'The mouse hides under the table.',
          'A car drives down the road.', 'A tree stands by the road.',
          'The dog barks loudly at night.', 'The cat sleeps on the warm roof.',
          'The mouse runs fast in the house.', 'The ball bounces on the floor.',
          'The cat and dog eat food.', 'The tree has green leaves.',
          'The car stops at the traffic light.', 'The dog wags its tail happily.',
          'The cat climbs the tall tree.', 'The mouse sneaks past the cat.',
          'The dog drinks water from the bowl.', 'The cat watches the bird outside.',
          'The mouse nibbles cheese quietly.', 'The ball is red and round.',
          'The tree grows tall and strong.', 'The car honks loudly in traffic.',
          'The dog runs through the garden.', 'The cat hides behind the curtain.',
          'The mouse escapes into the hole.', 'The ball rolls across the grass.',
          'The tree provides shade on sunny days.', 'The car speeds along the highway.',
          'The dog digs a hole in the yard.', 'The cat purrs softly while resting.',
          'The mouse chews on the wire.', 'The ball bounces off the wall.',
          "The tree's leaves fall in autumn.", 'The car is parked near the house.',
          'The dog sleeps peacefully by the fire.']

tokenized = [sentence.split() for sentence in corpus]
vocab = set(word for sentence in tokenized for word in sentence)
vocab_size = len(vocab)

SUBLANE = 8
LANE = 128
TILE_V = 512     # output tile width: multiple of 256 (v6e/v7x MXU); sweep 512-2048


def _round_up(x, m):
    return (x + m - 1) // m * m


def word2vec_kernel(idx_ref, emb_hbm, w_ref, b_ref, out_ref, gath_ref, sem):
    """One grid step handles one TILE_V-wide slice of the (padded) vocab.

    idx_ref  : SMEM [B_pad] i32 (scalar prefetch)  - center word indices
    emb_hbm  : HBM  [V, D_pad] f32 (pl.ANY)        - embedding table (never VMEM-resident)
    w_ref    : VMEM [D_pad, TILE_V] bf16           - projection weight tile (pre-transposed)
    b_ref    : VMEM [1, TILE_V] bf16               - bias tile
    out_ref  : VMEM [B_pad, TILE_V] f32            - output tile
    gath_ref : VMEM [B_pad, D_pad] f32 scratch     - gathered embedding rows (persists)
    sem      : DMA semaphores [B_pad]
    """
    B_pad = out_ref.shape[0]

    # One-time gather prologue: DMA the B_pad indexed rows HBM -> VMEM scratch.
    # Scratch persists across grid steps, so every later V tile reuses it for
    # free instead of re-gathering.
    @pl.when(pl.program_id(0) == 0)
    def _():
        copies = []
        for b in range(B_pad):              # B_pad is tiny & static -> unrolled
            row = idx_ref[b]
            cp = pltpu.make_async_copy(
                emb_hbm.at[pl.ds(row, 1)],  # [1, D_pad] row in HBM
                gath_ref.at[pl.ds(b, 1)],   # [1, D_pad] row in VMEM
                sem.at[b],
            )
            cp.start()
            copies.append(cp)
        for cp in copies:
            cp.wait()

    # Projection: [B_pad, D_pad](bf16) @ [D_pad, TILE_V](bf16) -> f32 on the
    # MXU, bias added in the same epilogue, lane-dense (multiple-of-128) store.
    lhs = gath_ref[...].astype(jnp.bfloat16)   # one-vreg VPU cast, hidden under W DMA
    out_ref[...] = (
        jnp.dot(lhs, w_ref[...], preferred_element_type=jnp.float32)
        + b_ref[...].astype(jnp.float32)
    )


def init_word2vec_params(key, vocab_size, embedding_dim, *, tile_v=TILE_V):
    """Build parameters ONCE in the padded / pre-transposed / bf16 layout the
    kernel consumes, so the forward path does no per-call layout fixup."""
    k_emb, k_w, k_b = jax.random.split(key, 3)
    V, D = vocab_size, embedding_dim
    D_pad = _round_up(D, LANE)
    V_pad = _round_up(V, tile_v)

    # nn.Embedding default init: N(0, 1)
    emb = jax.random.normal(k_emb, (V, D), dtype=jnp.float32)
    # nn.Linear default init: U(-1/sqrt(in), 1/sqrt(in))
    bound = 1.0 / (D ** 0.5)
    lin_w = jax.random.uniform(k_w, (V, D), jnp.float32, -bound, bound)
    lin_b = jax.random.uniform(k_b, (V,), jnp.float32, -bound, bound)

    # Kernel layouts:
    #   emb_pad : [V, D_pad] f32   - D padded to a lane multiple; V NOT padded
    #             (table stays in HBM and is only row-gathered by index).
    #   w_t     : [D_pad, V_pad] bf16 - pre-transposed MXU RHS, streamed per tile.
    #   bias    : [1, V_pad] bf16
    emb_pad = jnp.zeros((V, D_pad), jnp.float32).at[:, :D].set(emb)
    w_t = (jnp.zeros((D_pad, V_pad), jnp.bfloat16)
           .at[:D, :V].set(lin_w.T.astype(jnp.bfloat16)))
    bias = (jnp.zeros((1, V_pad), jnp.bfloat16)
            .at[0, :V].set(lin_b.astype(jnp.bfloat16)))

    return {
        "vocab_size": V, "embedding_dim": D,
        "emb": emb_pad, "w_t": w_t, "bias": bias,
        # Raw f32 parameters kept only for the reference check in __main__.
        "emb_f32": emb, "lin_w_f32": lin_w, "lin_b_f32": lin_b,
    }


def word2vec_forward(center_words, params, *, tile_v=TILE_V):
    """center_words: [B] int -> logits [B, vocab_size] float32."""
    emb, w_t, bias = params["emb"], params["w_t"], params["bias"]
    V = params["vocab_size"]
    D_pad = emb.shape[1]
    V_pad = w_t.shape[1]
    num_v_tiles = V_pad // tile_v

    B = center_words.shape[0]
    B_pad = _round_up(B, SUBLANE)

    # Clamp (an OOB word id would otherwise fault the gather DMA) and pad the
    # index vector; padded rows reuse index 0 and are sliced off below.
    idx = jnp.zeros((B_pad,), jnp.int32).at[:B].set(
        jnp.clip(center_words.astype(jnp.int32), 0, V - 1))

    out_padded = pl.pallas_call(
        word2vec_kernel,
        out_shape=jax.ShapeDtypeStruct((B_pad, V_pad), jnp.float32),
        grid_spec=pltpu.PrefetchScalarGridSpec(
            num_scalar_prefetch=1,                 # idx -> SMEM scalar path
            grid=(num_v_tiles,),
            in_specs=[
                # Embedding table stays in HBM; only B rows are DMA'd in-kernel.
                pl.BlockSpec(memory_space=pl.ANY),
                # Projection weight tile, pre-transposed [D_pad, tile_v], bf16.
                pl.BlockSpec((D_pad, tile_v), lambda j, idx_ref: (0, j)),
                # Bias tile.
                pl.BlockSpec((1, tile_v), lambda j, idx_ref: (0, j)),
            ],
            out_specs=pl.BlockSpec((B_pad, tile_v), lambda j, idx_ref: (0, j)),
            scratch_shapes=[
                pltpu.VMEM((B_pad, D_pad), jnp.float32),   # gathered embeddings
                pltpu.SemaphoreType.DMA((B_pad,)),          # one sem per row DMA
            ],
        ),
        compiler_params=pltpu.CompilerParams(
            # "arbitrary": the one-time gather (program_id==0) fills a scratch
            # that must persist for every later V tile on the same core.
            dimension_semantics=("arbitrary",),
        ),
    )(idx, emb, w_t, bias)

    return out_padded[:B, :V]


if __name__ == "__main__":
    key = jax.random.PRNGKey(0)
    k_params, k_idx = jax.random.split(key, 2)

    params = init_word2vec_params(k_params, vocab_size, embedding_dim)

    B = 8   # small batch of center-word indices
    center_words = jax.random.randint(k_idx, (B,), 0, vocab_size, dtype=jnp.int32)

    out = word2vec_forward(center_words, params)
    out = jax.block_until_ready(out)
    assert out.shape == (B, vocab_size)

    # Reference 1 (tight): the exact computation the kernel performs, with the
    # same bf16-quantized weights/bias and bf16 activations, f32 accumulate.
    emb_rows = jnp.take(params["emb_f32"], center_words, axis=0)
    lhs_q = emb_rows.astype(jnp.bfloat16).astype(jnp.float32)
    w_q = params["lin_w_f32"].astype(jnp.bfloat16).astype(jnp.float32)
    b_q = params["lin_b_f32"].astype(jnp.bfloat16).astype(jnp.float32)
    ref_q = jnp.dot(lhs_q, w_q.T, precision=jax.lax.Precision.HIGHEST) + b_q
    assert jnp.allclose(out, ref_q, atol=1e-4, rtol=1e-4)

    # Reference 2 (module semantics): full-f32 PyTorch-equivalent forward;
    # tolerance loosened to account for bf16 weight/bias streaming.
    ref_f32 = emb_rows @ params["lin_w_f32"].T + params["lin_b_f32"]
    assert jnp.allclose(out, ref_f32, atol=5e-2, rtol=5e-2)

    print("KERNEL_OK")
</pallas_src>

<mosaic_0001>
module attributes {stable_mosaic.version = 11 : i64} {
  func.func @word2vec_kernel(%arg0: i32, %arg1: memref<8xi32, #tpu.memory_space<smem>>, %arg2: memref<112x128xf32, #tpu.memory_space<any>>, %arg3: memref<128x512xbf16, #tpu.memory_space<vmem>>, %arg4: memref<1x512xbf16, #tpu.memory_space<vmem>>, %arg5: memref<8x512xf32, #tpu.memory_space<vmem>>, %arg6: memref<8x128xf32, #tpu.memory_space<vmem>>, %arg7: memref<8x!tpu.dma_semaphore, #tpu.memory_space<semaphore_mem>>) attributes {dimension_semantics = [#tpu.dimension_semantics<arbitrary>], iteration_bounds = array<i64: 1>, scalar_prefetch = 1 : i64, scratch_operands = 2 : i64, tpu.core_type = #tpu.core_type<tc>, window_params = [{}, {transform_indices = @transform_1, window_bounds = array<i64: 128, 512>}, {transform_indices = @transform_2, window_bounds = array<i64: 1, 512>}, {transform_indices = @transform_3, window_bounds = array<i64: 8, 512>}]} {
    %c0_i32 = arith.constant 0 : i32
    %0 = arith.cmpi eq, %arg0, %c0_i32 : i32
    %1 = arith.extui %0 : i1 to i32
    %c0_i32_0 = arith.constant 0 : i32
    %2 = arith.cmpi ne, %1, %c0_i32_0 : i32
    scf.if %2 {
      %c0_8 = arith.constant 0 : index
      %12 = memref.load %arg1[%c0_8] : memref<8xi32, #tpu.memory_space<smem>>
      %c0_i32_9 = arith.constant 0 : i32
      %c0_i32_10 = arith.constant 0 : i32
      %13 = tpu.memref_slice %arg2[%12, %c0_i32_10] : memref<112x128xf32, #tpu.memory_space<any>> -> memref<1x128xf32, #tpu.memory_space<any>>
      %c0_i32_11 = arith.constant 0 : i32
      %c0_i32_12 = arith.constant 0 : i32
      %14 = tpu.memref_slice %arg6[%c0_i32_11, %c0_i32_12] : memref<8x128xf32, #tpu.memory_space<vmem>> -> memref<1x128xf32, #tpu.memory_space<vmem>>
      %15 = tpu.memref_slice %arg7[%c0_i32_9] : memref<8x!tpu.dma_semaphore, #tpu.memory_space<semaphore_mem>> -> memref<1x!tpu.dma_semaphore, #tpu.memory_space<semaphore_mem>>
      %16 = tpu.memref_squeeze %15 : memref<1x!tpu.dma_semaphore, #tpu.memory_space<semaphore_mem>> -> memref<!tpu.dma_semaphore, #tpu.memory_space<semaphore_mem>>
      tpu.enqueue_dma source(%13 : memref<1x128xf32, #tpu.memory_space<any>>) target(%14 : memref<1x128xf32, #tpu.memory_space<vmem>>) target_semaphore(%16 : memref<!tpu.dma_semaphore, #tpu.memory_space<semaphore_mem>>)
      %c1 = arith.constant 1 : index
      %17 = memref.load %arg1[%c1] : memref<8xi32, #tpu.memory_space<smem>>
      %c1_i32 = arith.constant 1 : i32
      %c0_i32_13 = arith.constant 0 : i32
      %18 = tpu.memref_slice %arg2[%17, %c0_i32_13] : memref<112x128xf32, #tpu.memory_space<any>> -> memref<1x128xf32, #tpu.memory_space<any>>
      %c1_i32_14 = arith.constant 1 : i32
      %c0_i32_15 = arith.constant 0 : i32
      %19 = tpu.memref_slice %arg6[%c1_i32_14, %c0_i32_15] : memref<8x128xf32, #tpu.memory_space<vmem>> -> memref<1x128xf32, #tpu.memory_space<vmem>>
      %20 = tpu.memref_slice %arg7[%c1_i32] : memref<8x!tpu.dma_semaphore, #tpu.memory_space<semaphore_mem>> -> memref<1x!tpu.dma_semaphore, #tpu.memory_space<semaphore_mem>>
      %21 = tpu.memref_squeeze %20 : memref<1x!tpu.dma_semaphore, #tpu.memory_space<semaphore_mem>> -> memref<!tpu.dma_semaphore, #tpu.memory_space<semaphore_mem>>
      tpu.enqueue_dma source(%18 : memref<1x128xf32, #tpu.memory_space<any>>) target(%19 : memref<1x128xf32, #tpu.memory_space<vmem>>) target_semaphore(%21 : memref<!tpu.dma_semaphore, #tpu.memory_space<semaphore_mem>>)
      %c2 = arith.constant 2 : index
      %22 = memref.load %arg1[%c2] : memref<8xi32, #tpu.memory_space<smem>>
      %c2_i32 = arith.constant 2 : i32
      %c0_i32_16 = arith.constant 0 : i32
      %23 = tpu.memref_slice %arg2[%22, %c0_i32_16] : memref<112x128xf32, #tpu.memory_space<any>> -> memref<1x128xf32, #tpu.memory_space<any>>
      %c2_i32_17 = arith.constant 2 : i32
      %c0_i32_18 = arith.constant 0 : i32
      %24 = tpu.memref_slice %arg6[%c2_i32_17, %c0_i32_18] : memref<8x128xf32, #tpu.memory_space<vmem>> -> memref<1x128xf32, #tpu.memory_space<vmem>>
      %25 = tpu.memref_slice %arg7[%c2_i32] : memref<8x!tpu.dma_semaphore, #tpu.memory_space<semaphore_mem>> -> memref<1x!tpu.dma_semaphore, #tpu.memory_space<semaphore_mem>>
      %26 = tpu.memref_squeeze %25 : memref<1x!tpu.dma_semaphore, #tpu.memory_space<semaphore_mem>> -> memref<!tpu.dma_semaphore, #tpu.memory_space<semaphore_mem>>
      tpu.enqueue_dma source(%23 : memref<1x128xf32, #tpu.memory_space<any>>) target(%24 : memref<1x128xf32, #tpu.memory_space<vmem>>) target_semaphore(%26 : memref<!tpu.dma_semaphore, #tpu.memory_space<semaphore_mem>>)
      %c3 = arith.constant 3 : index
      %27 = memref.load %arg1[%c3] : memref<8xi32, #tpu.memory_space<smem>>
      %c3_i32 = arith.constant 3 : i32
      %c0_i32_19 = arith.constant 0 : i32
      %28 = tpu.memref_slice %arg2[%27, %c0_i32_19] : memref<112x128xf32, #tpu.memory_space<any>> -> memref<1x128xf32, #tpu.memory_space<any>>
      %c3_i32_20 = arith.constant 3 : i32
      %c0_i32_21 = arith.constant 0 : i32
      %29 = tpu.memref_slice %arg6[%c3_i32_20, %c0_i32_21] : memref<8x128xf32, #tpu.memory_space<vmem>> -> memref<1x128xf32, #tpu.memory_space<vmem>>
      %30 = tpu.memref_slice %arg7[%c3_i32] : memref<8x!tpu.dma_semaphore, #tpu.memory_space<semaphore_mem>> -> memref<1x!tpu.dma_semaphore, #tpu.memory_space<semaphore_mem>>
      %31 = tpu.memref_squeeze %30 : memref<1x!tpu.dma_semaphore, #tpu.memory_space<semaphore_mem>> -> memref<!tpu.dma_semaphore, #tpu.memory_space<semaphore_mem>>
      tpu.enqueue_dma source(%28 : memref<1x128xf32, #tpu.memory_space<any>>) target(%29 : memref<1x128xf32, #tpu.memory_space<vmem>>) target_semaphore(%31 : memref<!tpu.dma_semaphore, #tpu.memory_space<semaphore_mem>>)
      %c4 = arith.constant 4 : index
      %32 = memref.load %arg1[%c4] : memref<8xi32, #tpu.memory_space<smem>>
      %c4_i32 = arith.constant 4 : i32
      %c0_i32_22 = arith.constant 0 : i32
      %33 = tpu.memref_slice %arg2[%32, %c0_i32_22] : memref<112x128xf32, #tpu.memory_space<any>> -> memref<1x128xf32, #tpu.memory_space<any>>
      %c4_i32_23 = arith.constant 4 : i32
      %c0_i32_24 = arith.constant 0 : i32
      %34 = tpu.memref_slice %arg6[%c4_i32_23, %c0_i32_24] : memref<8x128xf32, #tpu.memory_space<vmem>> -> memref<1x128xf32, #tpu.memory_space<vmem>>
      %35 = tpu.memref_slice %arg7[%c4_i32] : memref<8x!tpu.dma_semaphore, #tpu.memory_space<semaphore_mem>> -> memref<1x!tpu.dma_semaphore, #tpu.memory_space<semaphore_mem>>
      %36 = tpu.memref_squeeze %35 : memref<1x!tpu.dma_semaphore, #tpu.memory_space<semaphore_mem>> -> memref<!tpu.dma_semaphore, #tpu.memory_space<semaphore_mem>>
      tpu.enqueue_dma source(%33 : memref<1x128xf32, #tpu.memory_space<any>>) target(%34 : memref<1x128xf32, #tpu.memory_space<vmem>>) target_semaphore(%36 : memref<!tpu.dma_semaphore, #tpu.memory_space<semaphore_mem>>)
      %c5 = arith.constant 5 : index
      %37 = memref.load %arg1[%c5] : memref<8xi32, #tpu.memory_space<smem>>
      %c5_i32 = arith.constant 5 : i32
      %c0_i32_25 = arith.constant 0 : i32
      %38 = tpu.memref_slice %arg2[%37, %c0_i32_25] : memref<112x128xf32, #tpu.memory_space<any>> -> memref<1x128xf32, #tpu.memory_space<any>>
      %c5_i32_26 = arith.constant 5 : i32
      %c0_i32_27 = arith.constant 0 : i32
      %39 = tpu.memref_slice %arg6[%c5_i32_26, %c0_i32_27] : memref<8x128xf32, #tpu.memory_space<vmem>> -> memref<1x128xf32, #tpu.memory_space<vmem>>
      %40 = tpu.memref_slice %arg7[%c5_i32] : memref<8x!tpu.dma_semaphore, #tpu.memory_space<semaphore_mem>> -> memref<1x!tpu.dma_semaphore, #tpu.memory_space<semaphore_mem>>
      %41 = tpu.memref_squeeze %40 : memref<1x!tpu.dma_semaphore, #tpu.memory_space<semaphore_mem>> -> memref<!tpu.dma_semaphore, #tpu.memory_space<semaphore_mem>>
      tpu.enqueue_dma source(%38 : memref<1x128xf32, #tpu.memory_space<any>>) target(%39 : memref<1x128xf32, #tpu.memory_space<vmem>>) target_semaphore(%41 : memref<!tpu.dma_semaphore, #tpu.memory_space<semaphore_mem>>)
      %c6 = arith.constant 6 : index
      %42 = memref.load %arg1[%c6] : memref<8xi32, #tpu.memory_space<smem>>
      %c6_i32 = arith.constant 6 : i32
      %c0_i32_28 = arith.constant 0 : i32
      %43 = tpu.memref_slice %arg2[%42, %c0_i32_28] : memref<112x128xf32, #tpu.memory_space<any>> -> memref<1x128xf32, #tpu.memory_space<any>>
      %c6_i32_29 = arith.constant 6 : i32
      %c0_i32_30 = arith.constant 0 : i32
      %44 = tpu.memref_slice %arg6[%c6_i32_29, %c0_i32_30] : memref<8x128xf32, #tpu.memory_space<vmem>> -> memref<1x128xf32, #tpu.memory_space<vmem>>
      %45 = tpu.memref_slice %arg7[%c6_i32] : memref<8x!tpu.dma_semaphore, #tpu.memory_space<semaphore_mem>> -> memref<1x!tpu.dma_semaphore, #tpu.memory_space<semaphore_mem>>
      %46 = tpu.memref_squeeze %45 : memref<1x!tpu.dma_semaphore, #tpu.memory_space<semaphore_mem>> -> memref<!tpu.dma_semaphore, #tpu.memory_space<semaphore_mem>>
      tpu.enqueue_dma source(%43 : memref<1x128xf32, #tpu.memory_space<any>>) target(%44 : memref<1x128xf32, #tpu.memory_space<vmem>>) target_semaphore(%46 : memref<!tpu.dma_semaphore, #tpu.memory_space<semaphore_mem>>)
      %c7 = arith.constant 7 : index
      %47 = memref.load %arg1[%c7] : memref<8xi32, #tpu.memory_space<smem>>
      %c7_i32 = arith.constant 7 : i32
      %c0_i32_31 = arith.constant 0 : i32
      %48 = tpu.memref_slice %arg2[%47, %c0_i32_31] : memref<112x128xf32, #tpu.memory_space<any>> -> memref<1x128xf32, #tpu.memory_space<any>>
      %c7_i32_32 = arith.constant 7 : i32
      %c0_i32_33 = arith.constant 0 : i32
      %49 = tpu.memref_slice %arg6[%c7_i32_32, %c0_i32_33] : memref<8x128xf32, #tpu.memory_space<vmem>> -> memref<1x128xf32, #tpu.memory_space<vmem>>
      %50 = tpu.memref_slice %arg7[%c7_i32] : memref<8x!tpu.dma_semaphore, #tpu.memory_space<semaphore_mem>> -> memref<1x!tpu.dma_semaphore, #tpu.memory_space<semaphore_mem>>
      %51 = tpu.memref_squeeze %50 : memref<1x!tpu.dma_semaphore, #tpu.memory_space<semaphore_mem>> -> memref<!tpu.dma_semaphore, #tpu.memory_space<semaphore_mem>>
      tpu.enqueue_dma source(%48 : memref<1x128xf32, #tpu.memory_space<any>>) target(%49 : memref<1x128xf32, #tpu.memory_space<vmem>>) target_semaphore(%51 : memref<!tpu.dma_semaphore, #tpu.memory_space<semaphore_mem>>)
      %c0_i32_34 = arith.constant 0 : i32
      %c0_i32_35 = arith.constant 0 : i32
      %52 = tpu.memref_slice %arg2[%12, %c0_i32_35] : memref<112x128xf32, #tpu.memory_space<any>> -> memref<1x128xf32, #tpu.memory_space<any>>
      %c0_i32_36 = arith.constant 0 : i32
      %c0_i32_37 = arith.constant 0 : i32
      %53 = tpu.memref_slice %arg6[%c0_i32_36, %c0_i32_37] : memref<8x128xf32, #tpu.memory_space<vmem>> -> memref<1x128xf32, #tpu.memory_space<vmem>>
      %54 = tpu.memref_slice %arg7[%c0_i32_34] : memref<8x!tpu.dma_semaphore, #tpu.memory_space<semaphore_mem>> -> memref<1x!tpu.dma_semaphore, #tpu.memory_space<semaphore_mem>>
      %55 = tpu.memref_squeeze %54 : memref<1x!tpu.dma_semaphore, #tpu.memory_space<semaphore_mem>> -> memref<!tpu.dma_semaphore, #tpu.memory_space<semaphore_mem>>
      tpu.wait_dma2 semaphore(%55 : memref<!tpu.dma_semaphore, #tpu.memory_space<semaphore_mem>>) src(%52 : memref<1x128xf32, #tpu.memory_space<any>>) dst(%53 : memref<1x128xf32, #tpu.memory_space<vmem>>)
      %c1_i32_38 = arith.constant 1 : i32
      %c0_i32_39 = arith.constant 0 : i32
      %56 = tpu.memref_slice %arg2[%17, %c0_i32_39] : memref<112x128xf32, #tpu.memory_space<any>> -> memref<1x128xf32, #tpu.memory_space<any>>
      %c1_i32_40 = arith.constant 1 : i32
      %c0_i32_41 = arith.constant 0 : i32
      %57 = tpu.memref_slice %arg6[%c1_i32_40, %c0_i32_41] : memref<8x128xf32, #tpu.memory_space<vmem>> -> memref<1x128xf32, #tpu.memory_space<vmem>>
      %58 = tpu.memref_slice %arg7[%c1_i32_38] : memref<8x!tpu.dma_semaphore, #tpu.memory_space<semaphore_mem>> -> memref<1x!tpu.dma_semaphore, #tpu.memory_space<semaphore_mem>>
      %59 = tpu.memref_squeeze %58 : memref<1x!tpu.dma_semaphore, #tpu.memory_space<semaphore_mem>> -> memref<!tpu.dma_semaphore, #tpu.memory_space<semaphore_mem>>
      tpu.wait_dma2 semaphore(%59 : memref<!tpu.dma_semaphore, #tpu.memory_space<semaphore_mem>>) src(%56 : memref<1x128xf32, #tpu.memory_space<any>>) dst(%57 : memref<1x128xf32, #tpu.memory_space<vmem>>)
      %c2_i32_42 = arith.constant 2 : i32
      %c0_i32_43 = arith.constant 0 : i32
      %60 = tpu.memref_slice %arg2[%22, %c0_i32_43] : memref<112x128xf32, #tpu.memory_space<any>> -> memref<1x128xf32, #tpu.memory_space<any>>
      %c2_i32_44 = arith.constant 2 : i32
      %c0_i32_45 = arith.constant 0 : i32
      %61 = tpu.memref_slice %arg6[%c2_i32_44, %c0_i32_45] : memref<8x128xf32, #tpu.memory_space<vmem>> -> memref<1x128xf32, #tpu.memory_space<vmem>>
      %62 = tpu.memref_slice %arg7[%c2_i32_42] : memref<8x!tpu.dma_semaphore, #tpu.memory_space<semaphore_mem>> -> memref<1x!tpu.dma_semaphore, #tpu.memory_space<semaphore_mem>>
      %63 = tpu.memref_squeeze %62 : memref<1x!tpu.dma_semaphore, #tpu.memory_space<semaphore_mem>> -> memref<!tpu.dma_semaphore, #tpu.memory_space<semaphore_mem>>
      tpu.wait_dma2 semaphore(%63 : memref<!tpu.dma_semaphore, #tpu.memory_space<semaphore_mem>>) src(%60 : memref<1x128xf32, #tpu.memory_space<any>>) dst(%61 : memref<1x128xf32, #tpu.memory_space<vmem>>)
      %c3_i32_46 = arith.constant 3 : i32
      %c0_i32_47 = arith.constant 0 : i32
      %64 = tpu.memref_slice %arg2[%27, %c0_i32_47] : memref<112x128xf32, #tpu.memory_space<any>> -> memref<1x128xf32, #tpu.memory_space<any>>
      %c3_i32_48 = arith.constant 3 : i32
      %c0_i32_49 = arith.constant 0 : i32
      %65 = tpu.memref_slice %arg6[%c3_i32_48, %c0_i32_49] : memref<8x128xf32, #tpu.memory_space<vmem>> -> memref<1x128xf32, #tpu.memory_space<vmem>>
      %66 = tpu.memref_slice %arg7[%c3_i32_46] : memref<8x!tpu.dma_semaphore, #tpu.memory_space<semaphore_mem>> -> memref<1x!tpu.dma_semaphore, #tpu.memory_space<semaphore_mem>>
      %67 = tpu.memref_squeeze %66 : memref<1x!tpu.dma_semaphore, #tpu.memory_space<semaphore_mem>> -> memref<!tpu.dma_semaphore, #tpu.memory_space<semaphore_mem>>
      tpu.wait_dma2 semaphore(%67 : memref<!tpu.dma_semaphore, #tpu.memory_space<semaphore_mem>>) src(%64 : memref<1x128xf32, #tpu.memory_space<any>>) dst(%65 : memref<1x128xf32, #tpu.memory_space<vmem>>)
      %c4_i32_50 = arith.constant 4 : i32
      %c0_i32_51 = arith.constant 0 : i32
      %68 = tpu.memref_slice %arg2[%32, %c0_i32_51] : memref<112x128xf32, #tpu.memory_space<any>> -> memref<1x128xf32, #tpu.memory_space<any>>
      %c4_i32_52 = arith.constant 4 : i32
      %c0_i32_53 = arith.constant 0 : i32
      %69 = tpu.memref_slice %arg6[%c4_i32_52, %c0_i32_53] : memref<8x128xf32, #tpu.memory_space<vmem>> -> memref<1x128xf32, #tpu.memory_space<vmem>>
      %70 = tpu.memref_slice %arg7[%c4_i32_50] : memref<8x!tpu.dma_semaphore, #tpu.memory_space<semaphore_mem>> -> memref<1x!tpu.dma_semaphore, #tpu.memory_space<semaphore_mem>>
      %71 = tpu.memref_squeeze %70 : memref<1x!tpu.dma_semaphore, #tpu.memory_space<semaphore_mem>> -> memref<!tpu.dma_semaphore, #tpu.memory_space<semaphore_mem>>
      tpu.wait_dma2 semaphore(%71 : memref<!tpu.dma_semaphore, #tpu.memory_space<semaphore_mem>>) src(%68 : memref<1x128xf32, #tpu.memory_space<any>>) dst(%69 : memref<1x128xf32, #tpu.memory_space<vmem>>)
      %c5_i32_54 = arith.constant 5 : i32
      %c0_i32_55 = arith.constant 0 : i32
      %72 = tpu.memref_slice %arg2[%37, %c0_i32_55] : memref<112x128xf32, #tpu.memory_space<any>> -> memref<1x128xf32, #tpu.memory_space<any>>
      %c5_i32_56 = arith.constant 5 : i32
      %c0_i32_57 = arith.constant 0 : i32
      %73 = tpu.memref_slice %arg6[%c5_i32_56, %c0_i32_57] : memref<8x128xf32, #tpu.memory_space<vmem>> -> memref<1x128xf32, #tpu.memory_space<vmem>>
      %74 = tpu.memref_slice %arg7[%c5_i32_54] : memref<8x!tpu.dma_semaphore, #tpu.memory_space<semaphore_mem>> -> memref<1x!tpu.dma_semaphore, #tpu.memory_space<semaphore_mem>>
      %75 = tpu.memref_squeeze %74 : memref<1x!tpu.dma_semaphore, #tpu.memory_space<semaphore_mem>> -> memref<!tpu.dma_semaphore, #tpu.memory_space<semaphore_mem>>
      tpu.wait_dma2 semaphore(%75 : memref<!tpu.dma_semaphore, #tpu.memory_space<semaphore_mem>>) src(%72 : memref<1x128xf32, #tpu.memory_space<any>>) dst(%73 : memref<1x128xf32, #tpu.memory_space<vmem>>)
      %c6_i32_58 = arith.constant 6 : i32
      %c0_i32_59 = arith.constant 0 : i32
      %76 = tpu.memref_slice %arg2[%42, %c0_i32_59] : memref<112x128xf32, #tpu.memory_space<any>> -> memref<1x128xf32, #tpu.memory_space<any>>
      %c6_i32_60 = arith.constant 6 : i32
      %c0_i32_61 = arith.constant 0 : i32
      %77 = tpu.memref_slice %arg6[%c6_i32_60, %c0_i32_61] : memref<8x128xf32, #tpu.memory_space<vmem>> -> memref<1x128xf32, #tpu.memory_space<vmem>>
      %78 = tpu.memref_slice %arg7[%c6_i32_58] : memref<8x!tpu.dma_semaphore, #tpu.memory_space<semaphore_mem>> -> memref<1x!tpu.dma_semaphore, #tpu.memory_space<semaphore_mem>>
      %79 = tpu.memref_squeeze %78 : memref<1x!tpu.dma_semaphore, #tpu.memory_space<semaphore_mem>> -> memref<!tpu.dma_semaphore, #tpu.memory_space<semaphore_mem>>
      tpu.wait_dma2 semaphore(%79 : memref<!tpu.dma_semaphore, #tpu.memory_space<semaphore_mem>>) src(%76 : memref<1x128xf32, #tpu.memory_space<any>>) dst(%77 : memref<1x128xf32, #tpu.memory_space<vmem>>)
      %c7_i32_62 = arith.constant 7 : i32
      %c0_i32_63 = arith.constant 0 : i32
      %80 = tpu.memref_slice %arg2[%47, %c0_i32_63] : memref<112x128xf32, #tpu.memory_space<any>> -> memref<1x128xf32, #tpu.memory_space<any>>
      %c7_i32_64 = arith.constant 7 : i32
      %c0_i32_65 = arith.constant 0 : i32
      %81 = tpu.memref_slice %arg6[%c7_i32_64, %c0_i32_65] : memref<8x128xf32, #tpu.memory_space<vmem>> -> memref<1x128xf32, #tpu.memory_space<vmem>>
      %82 = tpu.memref_slice %arg7[%c7_i32_62] : memref<8x!tpu.dma_semaphore, #tpu.memory_space<semaphore_mem>> -> memref<1x!tpu.dma_semaphore, #tpu.memory_space<semaphore_mem>>
      %83 = tpu.memref_squeeze %82 : memref<1x!tpu.dma_semaphore, #tpu.memory_space<semaphore_mem>> -> memref<!tpu.dma_semaphore, #tpu.memory_space<semaphore_mem>>
      tpu.wait_dma2 semaphore(%83 : memref<!tpu.dma_semaphore, #tpu.memory_space<semaphore_mem>>) src(%80 : memref<1x128xf32, #tpu.memory_space<any>>) dst(%81 : memref<1x128xf32, #tpu.memory_space<vmem>>)
    } else {
    }
    %c0 = arith.constant 0 : index
    %c0_1 = arith.constant 0 : index
    %3 = vector.load %arg6[%c0, %c0_1] : memref<8x128xf32, #tpu.memory_space<vmem>>, vector<8x128xf32>
    %4 = arith.truncf %3 : vector<8x128xf32> to vector<8x128xbf16>
    %c0_2 = arith.constant 0 : index
    %c0_3 = arith.constant 0 : index
    %5 = vector.load %arg3[%c0_2, %c0_3] : memref<128x512xbf16, #tpu.memory_space<vmem>>, vector<128x512xbf16>
    %cst = arith.constant dense<0.000000e+00> : vector<8x512xf32>
    %6 = tpu.matmul %4, %5, %cst {dimension_numbers = #tpu.dot_dimension_numbers<[1], [0], [0], [1], [0, 0, 1, 1], [], []>} : vector<8x128xbf16>, vector<128x512xbf16>, vector<8x512xf32> -> vector<8x512xf32>
    %c0_4 = arith.constant 0 : index
    %c0_5 = arith.constant 0 : index
    %7 = vector.load %arg4[%c0_4, %c0_5] : memref<1x512xbf16, #tpu.memory_space<vmem>>, vector<1x512xbf16>
    %8 = arith.extf %7 : vector<1x512xbf16> to vector<1x512xf32>
    %9 = vector.broadcast %8 : vector<1x512xf32> to vector<8x512xf32>
    %10 = arith.addf %6, %9 : vector<8x512xf32>
    %c0_6 = arith.constant 0 : index
    %c0_7 = arith.constant 0 : index
    %11 = vector.load %arg5[%c0_6, %c0_7] : memref<8x512xf32, #tpu.memory_space<vmem>>, vector<8x512xf32>
    tpu.vector_store %arg5[%c0_6, %c0_7], %10 {strides = array<i32>} : memref<8x512xf32, #tpu.memory_space<vmem>>, vector<8x512xf32>,
    return
  }
  func.func @transform_1(%arg0: i32, %arg1: memref<8xi32, #tpu.memory_space<smem>>) -> (i32, i32) {
    %c0_i32 = arith.constant 0 : i32
    %c0_i32_0 = arith.constant 0 : i32
    return %c0_i32, %arg0 : i32, i32
  }
  func.func @transform_2(%arg0: i32, %arg1: memref<8xi32, #tpu.memory_space<smem>>) -> (i32, i32) {
    %c0_i32 = arith.constant 0 : i32
    %c0_i32_0 = arith.constant 0 : i32
    return %c0_i32, %arg0 : i32, i32
  }
  func.func @transform_3(%arg0: i32, %arg1: memref<8xi32, #tpu.memory_space<smem>>) -> (i32, i32) {
    %c0_i32 = arith.constant 0 : i32
    %c0_i32_0 = arith.constant 0 : i32
    return %c0_i32, %arg0 : i32, i32
  }
}

</mosaic_0001>

<llo_original>
// kernel: tpu_custom_call.1
$region0: #{tpu_custom_call.1}
  #allocation0 [shape = 'u32[]', space=smem, size = 0x4, offset = 0x4, fixed_abs, tag = 'smem constant byte address 0x4 - core index']
  #allocation1 [shape = 'u32[144,128]{1,0:T(1,128)}', space=vmem, size = 0x12000, scoped, tag = 'internal scratch']
  #allocation2 [shape = 'f32[8,128]{1,0:T(8,128)}', space=vmem, size = 0x1000, scoped, tag = 'scratch operand']
  #allocation3 [shape = 's32[8]{0}', space=sflag, size = 0x20, scoped, tag = 'scratch operand']
  #allocation4 [shape = 's32[1]{0}', space=sflag, size = 0x4, scoped, tag = 'scoped memory for tpu_custom_call.1']
  #allocation5 [shape = 'u8[512]{0}', space=smem, size = 0x200, scoped, tag = 'prefetched SMEM operand 0']
  #allocation10 [shape = 's32[]', space=sflag, size = 0x4, offset = 0, fixed_abs, tag = 'sflag constant byte address 0x0 - dummy sync flag']
  #allocation11 [shape = 's32[]', space=sflag, size = 0x4, offset = 0, fixed_abs, tag = 'sflag constant byte address 0x0 - dummy sync flag']
  #allocation12 [shape = 'u32[]', space=smem, size = 0x4, offset = 0x44, fixed_abs, tag = 'smem constant byte address 0x44 - assertion arg 0']
  #allocation13 [shape = 'u32[]', space=smem, size = 0x4, offset = 0x48, fixed_abs, tag = 'smem constant byte address 0x48 - assertion arg 1']
  #allocation14 [shape = 's32[]', space=sflag, size = 0x4, offset = 0, fixed_abs, tag = 'sflag constant byte address 0x0 - dummy sync flag']
  #allocation15 [shape = 's32[]', space=sflag, size = 0x4, offset = 0, fixed_abs, tag = 'sflag constant byte address 0x0 - dummy sync flag']
  #allocation16 [shape = 's32[]', space=sflag, size = 0x4, offset = 0, fixed_abs, tag = 'sflag constant byte address 0x0 - dummy sync flag']
  #allocation17 [shape = 's32[]', space=sflag, size = 0x4, offset = 0, fixed_abs, tag = 'sflag constant byte address 0x0 - dummy sync flag']
  #allocation18 [shape = 's32[]', space=sflag, size = 0x4, offset = 0, fixed_abs, tag = 'sflag constant byte address 0x0 - dummy sync flag']
  #allocation19 [shape = 's32[]', space=sflag, size = 0x4, offset = 0, fixed_abs, tag = 'sflag constant byte address 0x0 - dummy sync flag']
  #allocation20 [shape = 's32[]', space=sflag, size = 0x4, offset = 0, fixed_abs, tag = 'sflag constant byte address 0x0 - dummy sync flag']
  #allocation21 [shape = 's32[]', space=sflag, size = 0x4, offset = 0, fixed_abs, tag = 'sflag constant byte address 0x0 - dummy sync flag']
  #allocation22 [shape = 's32[]', space=sflag, size = 0x4, offset = 0, fixed_abs, tag = 'sflag constant byte address 0x0 - dummy sync flag']
  #allocation23 [shape = 's32[]', space=sflag, size = 0x4, offset = 0, fixed_abs, tag = 'sflag constant byte address 0x0 - dummy sync flag']
  #allocation24 [shape = 's32[]', space=sflag, size = 0x4, offset = 0, fixed_abs, tag = 'sflag constant byte address 0x0 - dummy sync flag']
  #allocation25 [shape = 's32[]', space=sflag, size = 0x4, offset = 0, fixed_abs, tag = 'sflag constant byte address 0x0 - dummy sync flag']
  #allocation26 [shape = 's32[]', space=sflag, size = 0x4, offset = 0, fixed_abs, tag = 'sflag constant byte address 0x0 - dummy sync flag']
  #allocation27 [shape = 's32[]', space=sflag, size = 0x4, offset = 0, fixed_abs, tag = 'sflag constant byte address 0x0 - dummy sync flag']
  %s0 = inlined_call_operand.hbm [shape: s32[8], index: 0, kind: input, shape index: {}]
  %s1 = inlined_call_operand.hbm [shape: f32[112,128], index: 1, kind: input, shape index: {}]
  %s2 = inlined_call_operand.hbm [shape: bf16[128,512], index: 2, kind: input, shape index: {}]
  %s3 = inlined_call_operand.vmem [shape: bf16[1,512], index: 3, kind: input, shape index: {}]
  %s4 = inlined_call_operand.hbm [shape: f32[8,512], index: 4, kind: output, shape index: {}]
  %s5 = sld [smem:[#allocation0]]
  $region58: #{tpu_custom_call.1} parent=0
    _
  %s7 = ssub.s32 1, %s5
  %s8 = scalar_select 0, %s7, %s5
  %10 = dma.hbm_to_smem %s0, 16, [#allocation5], [#allocation4]
  %11 = dma.done [#allocation4], 16
  %12 = sfence
  $region1: #{tpu_custom_call.1} parent=0
    #allocation6 [shape = 'u8[131072]{0}', space=vmem, size = 0x20000, scoped, tag = 'input window, operand 2, single buffered']
    #allocation7 [shape = 's32[1]{0}', space=sflag, size = 0x4, scoped, tag = 'scoped memory for tpu_custom_call.1']
    #allocation8 [shape = 's32[1]{0}', space=sflag, size = 0x4, scoped, tag = 'scoped memory for tpu_custom_call.1']
    #allocation9 [shape = 'u8[16384]{0}', space=vmem, size = 0x4000, scoped, tag = 'output window, operand 0, single buffered']
    %13 = vsyncpa [#allocation7], 0
    %14 = vsyncpa [#allocation8], 0
    // Predicated region
    $region2: #{tpu_custom_call.1} parent=1 // pred_check
      _
    $region3: #{tpu_custom_call.1} parent=1 // pred_check_branch
      %16 = sbr.rel (0) target = $region5
    $region4: #{tpu_custom_call.1} parent=1 // pred_region
      %s18 = ssub.s32 4096, 4096
      %19 = vsyncadd [#allocation7], %s18
      %s20 = sshll.u32 [#allocation6], 4
      %s21 = int_to_ptr.vmem [resolvable:$true] %s20
      %26 = dma.hbm_to_vmem [thread:$0]  %s2, 4096, %s21, [#allocation7], 256, 256, 16
    $region5: #{tpu_custom_call.1} parent=1 // pred_fallthru
      _
    // Predicated region
    $region6: #{tpu_custom_call.1} parent=1 // pred_check
      _
    $region7: #{tpu_custom_call.1} parent=1 // pred_check_branch
      %28 = sbr.rel (0) target = $region9
    $region8: #{tpu_custom_call.1} parent=1 // pred_region
      _
    $region9: #{tpu_custom_call.1} parent=1 // pred_fallthru
      _
    // Predicated region
    $region10: #{tpu_custom_call.1} parent=1 // pred_check
      _
    $region11: #{tpu_custom_call.1} parent=1 // pred_check_branch
      %30 = sbr.rel (0) target = $region13
    $region12: #{tpu_custom_call.1} parent=1 // pred_region
      %31 = dma.done [#allocation7], 4096
    $region13: #{tpu_custom_call.1} parent=1 // pred_fallthru
      _
    %p33 = scmp.eq.s32.totalorder 0, 0
    // Predicated region
    $region14: #{tpu_custom_call.1} parent=1 // pred_check
      %p34 = pneg %p33
    $region15: #{tpu_custom_call.1} parent=1 // pred_check_branch
      %36 = sbr.rel (%p34) target = $region17
    $region16: #{tpu_custom_call.1} parent=1 // pred_region
      %s37 = sld [smem:[#allocation5]]
      %s38 = smul.addr %s37, 16
      %s39 = scalar_lea.hbm %s1, %s38
      // Predicated region
      $region18: #{tpu_custom_call.1} parent=16 // pred_check
        _
      $region19: #{tpu_custom_call.1} parent=16 // pred_check_branch
        %41 = sbr.rel target = $region21
      $region20: #{tpu_custom_call.1} parent=16 // pred_region
        %42 = sst [smem:[#allocation12]] [#allocation11]
        %43 = sst [smem:[#allocation13]] [#allocation10]
      $region21: #{tpu_custom_call.1} parent=16 // pred_fallthru
        _
      %45 = shalt.err (0)
      %s47 = sshll.u32 [#allocation2], 4
      %s48 = int_to_ptr.vmem [resolvable:$true] %s47
      %50 = dma.hbm_to_vmem [thread:$0]  %s39, 16, %s48, [#allocation3]
      %s51 = sld [smem:[#allocation5 + $0x1]]
      %s52 = smul.addr %s51, 16
      %s53 = scalar_lea.hbm %s1, %s52
      %s54 = scalar_lea.vmem [#allocation2], 1
      %s55 = scalar_lea.sflag [#allocation3], 1
      // Predicated region
      $region22: #{tpu_custom_call.1} parent=16 // pred_check
        _
      $region23: #{tpu_custom_call.1} parent=16 // pred_check_branch
        %57 = sbr.rel target = $region25
      $region24: #{tpu_custom_call.1} parent=16 // pred_region
        %58 = sst [smem:[#allocation12]] [#allocation15]
        %59 = sst [smem:[#allocation13]] [#allocation14]
      $region25: #{tpu_custom_call.1} parent=16 // pred_fallthru
        _
      %61 = shalt.err (0)
      %s63 = sshll.u32 %s54, 4
      %s64 = int_to_ptr.vmem [resolvable:$true] %s63
      %66 = dma.hbm_to_vmem [thread:$0]  %s53, 16, %s64, %s55
      %s67 = sld [smem:[#allocation5 + $0x2]]
      %s68 = smul.addr %s67, 16
      %s69 = scalar_lea.hbm %s1, %s68
      %s70 = scalar_lea.vmem [#allocation2], 2
      %s71 = scalar_lea.sflag [#allocation3], 2
      // Predicated region
      $region26: #{tpu_custom_call.1} parent=16 // pred_check
        _
      $region27: #{tpu_custom_call.1} parent=16 // pred_check_branch
        %73 = sbr.rel target = $region29
      $region28: #{tpu_custom_call.1} parent=16 // pred_region
        %74 = sst [smem:[#allocation12]] [#allocation17]
        %75 = sst [smem:[#allocation13]] [#allocation16]
      $region29: #{tpu_custom_call.1} parent=16 // pred_fallthru
        _
      %77 = shalt.err (0)
      %s79 = sshll.u32 %s70, 4
      %s80 = int_to_ptr.vmem [resolvable:$true] %s79
      %82 = dma.hbm_to_vmem [thread:$0]  %s69, 16, %s80, %s71
      %s83 = sld [smem:[#allocation5 + $0x3]]
      %s84 = smul.addr %s83, 16
      %s85 = scalar_lea.hbm %s1, %s84
      %s86 = scalar_lea.vmem [#allocation2], 3
      %s87 = scalar_lea.sflag [#allocation3], 3
      // Predicated region
      $region30: #{tpu_custom_call.1} parent=16 // pred_check
        _
      $region31: #{tpu_custom_call.1} parent=16 // pred_check_branch
        %89 = sbr.rel target = $region33
      $region32: #{tpu_custom_call.1} parent=16 // pred_region
        %90 = sst [smem:[#allocation12]] [#allocation19]
        %91 = sst [smem:[#allocation13]] [#allocation18]
      $region33: #{tpu_custom_call.1} parent=16 // pred_fallthru
        _
      %93 = shalt.err (0)
      %s95 = sshll.u32 %s86, 4
      %s96 = int_to_ptr.vmem [resolvable:$true] %s95
      %98 = dma.hbm_to_vmem [thread:$0]  %s85, 16, %s96, %s87
      %s99 = sld [smem:[#allocation5 + $0x4]]
      %s100 = smul.addr %s99, 16
      %s101 = scalar_lea.hbm %s1, %s100
      %s102 = scalar_lea.vmem [#allocation2], 4
      %s103 = scalar_lea.sflag [#allocation3], 4
      // Predicated region
      $region34: #{tpu_custom_call.1} parent=16 // pred_check
        _
      $region35: #{tpu_custom_call.1} parent=16 // pred_check_branch
        %105 = sbr.rel target = $region37
      $region36: #{tpu_custom_call.1} parent=16 // pred_region
        %106 = sst [smem:[#allocation12]] [#allocation21]
        %107 = sst [smem:[#allocation13]] [#allocation20]
      $region37: #{tpu_custom_call.1} parent=16 // pred_fallthru
        _
      %109 = shalt.err (0)
      %s111 = sshll.u32 %s102, 4
      %s112 = int_to_ptr.vmem [resolvable:$true] %s111
      %114 = dma.hbm_to_vmem [thread:$0]  %s101, 16, %s112, %s103
      %s115 = sld [smem:[#allocation5 + $0x5]]
      %s116 = smul.addr %s115, 16
      %s117 = scalar_lea.hbm %s1, %s116
      %s118 = scalar_lea.vmem [#allocation2], 5
      %s119 = scalar_lea.sflag [#allocation3], 5
      // Predicated region
      $region38: #{tpu_custom_call.1} parent=16 // pred_check
        _
      $region39: #{tpu_custom_call.1} parent=16 // pred_check_branch
        %121 = sbr.rel target = $region41
      $region40: #{tpu_custom_call.1} parent=16 // pred_region
        %122 = sst [smem:[#allocation12]] [#allocation23]
        %123 = sst [smem:[#allocation13]] [#allocation22]
      $region41: #{tpu_custom_call.1} parent=16 // pred_fallthru
        _
      %125 = shalt.err (0)
      %s127 = sshll.u32 %s118, 4
      %s128 = int_to_ptr.vmem [resolvable:$true] %s127
      %130 = dma.hbm_to_vmem [thread:$0]  %s117, 16, %s128, %s119
      %s131 = sld [smem:[#allocation5 + $0x6]]
      %s132 = smul.addr %s131, 16
      %s133 = scalar_lea.hbm %s1, %s132
      %s134 = scalar_lea.vmem [#allocation2], 6
      %s135 = scalar_lea.sflag [#allocation3], 6
      // Predicated region
      $region42: #{tpu_custom_call.1} parent=16 // pred_check
        _
      $region43: #{tpu_custom_call.1} parent=16 // pred_check_branch
        %137 = sbr.rel target = $region45
      $region44: #{tpu_custom_call.1} parent=16 // pred_region
        %138 = sst [smem:[#allocation12]] [#allocation25]
        %139 = sst [smem:[#allocation13]] [#allocation24]
      $region45: #{tpu_custom_call.1} parent=16 // pred_fallthru
        _
      %141 = shalt.err (0)
      %s143 = sshll.u32 %s134, 4
      %s144 = int_to_ptr.vmem [resolvable:$true] %s143
      %146 = dma.hbm_to_vmem [thread:$0]  %s133, 16, %s144, %s135
      %s147 = sld [smem:[#allocation5 + $0x7]]
      %s148 = smul.addr %s147, 16
      %s149 = scalar_lea.hbm %s1, %s148
      %s150 = scalar_lea.vmem [#allocation2], 7
      %s151 = scalar_lea.sflag [#allocation3], 7
      // Predicated region
      $region46: #{tpu_custom_call.1} parent=16 // pred_check
        _
      $region47: #{tpu_custom_call.1} parent=16 // pred_check_branch
        %153 = sbr.rel target = $region49
      $region48: #{tpu_custom_call.1} parent=16 // pred_region
        %154 = sst [smem:[#allocation12]] [#allocation27]
        %155 = sst [smem:[#allocation13]] [#allocation26]
      $region49: #{tpu_custom_call.1} parent=16 // pred_fallthru
        _
      %157 = shalt.err (0)
      %s159 = sshll.u32 %s150, 4
      %s160 = int_to_ptr.vmem [resolvable:$true] %s159
      %162 = dma.hbm_to_vmem [thread:$0]  %s149, 16, %s160, %s151
      %s163 = smul.u32 1, 1
      %s164 = sshll.u32 %s163, 4
      %165 = dma.done [#allocation3], %s164
      %s166 = sshll.u32 %s163, 4
      %167 = dma.done %s55, %s166
      %s168 = sshll.u32 %s163, 4
      %169 = dma.done %s71, %s168
      %s170 = sshll.u32 %s163, 4
      %171 = dma.done %s87, %s170
      %s172 = sshll.u32 %s163, 4
      %173 = dma.done %s103, %s172
      %s174 = sshll.u32 %s163, 4
      %175 = dma.done %s119, %s174
      %s176 = sshll.u32 %s163, 4
      %177 = dma.done %s135, %s176
      %s178 = sshll.u32 %s163, 4
      %179 = dma.done %s151, %s178
    $region17: #{tpu_custom_call.1} parent=1 // pred_fallthru
      _
    %v180 = vld [vmem:[#allocation2] sm:$0xff]
    %v181 = vpack.c.bf16 %v180, %v180
    %v182 = vld [vmem:[#allocation6] sm:$0xff]
    %v183 = vld [vmem:[#allocation6 + $0x8] sm:$0xff]
    %v184 = vld [vmem:[#allocation6 + $0x10] sm:$0xff]
    %v185 = vld [vmem:[#allocation6 + $0x18] sm:$0xff]
    %v186 = vld [vmem:[#allocation6 + $0x20] sm:$0xff]
    %v187 = vld [vmem:[#allocation6 + $0x28] sm:$0xff]
    %v188 = vld [vmem:[#allocation6 + $0x30] sm:$0xff]
    %v189 = vld [vmem:[#allocation6 + $0x38] sm:$0xff]
    %v190 = vld [vmem:[#allocation6 + $0x40] sm:$0xff]
    %v191 = vld [vmem:[#allocation6 + $0x48] sm:$0xff]
    %v192 = vld [vmem:[#allocation6 + $0x50] sm:$0xff]
    %v193 = vld [vmem:[#allocation6 + $0x58] sm:$0xff]
    %v194 = vld [vmem:[#allocation6 + $0x60] sm:$0xff]
    %v195 = vld [vmem:[#allocation6 + $0x68] sm:$0xff]
    %v196 = vld [vmem:[#allocation6 + $0x70] sm:$0xff]
    %v197 = vld [vmem:[#allocation6 + $0x78] sm:$0xff]
    %v198 = vld [vmem:[#allocation6 + $0x80] sm:$0xff]
    %v199 = vld [vmem:[#allocation6 + $0x88] sm:$0xff]
    %v200 = vld [vmem:[#allocation6 + $0x90] sm:$0xff]
    %v201 = vld [vmem:[#allocation6 + $0x98] sm:$0xff]
    %v202 = vld [vmem:[#allocation6 + $0xa0] sm:$0xff]
    %v203 = vld [vmem:[#allocation6 + $0xa8] sm:$0xff]
    %v204 = vld [vmem:[#allocation6 + $0xb0] sm:$0xff]
    %v205 = vld [vmem:[#allocation6 + $0xb8] sm:$0xff]
    %v206 = vld [vmem:[#allocation6 + $0xc0] sm:$0xff]
    %v207 = vld [vmem:[#allocation6 + $0xc8] sm:$0xff]
    %v208 = vld [vmem:[#allocation6 + $0xd0] sm:$0xff]
    %v209 = vld [vmem:[#allocation6 + $0xd8] sm:$0xff]
    %v210 = vld [vmem:[#allocation6 + $0xe0] sm:$0xff]
    %v211 = vld [vmem:[#allocation6 + $0xe8] sm:$0xff]
    %v212 = vld [vmem:[#allocation6 + $0xf0] sm:$0xff]
    %v213 = vld [vmem:[#allocation6 + $0xf8] sm:$0xff]
    %v214 = vld [vmem:[%s3] sm:$0xf]
    %v215 = vunpack.c.l.bf16 %v214
    %v217 = vlaneseq
    %v218 = vshrl.u32 %v217, 7
    %v219 = vsub.s32 0, %v218
    %v220 = vrot.slane %v215, %v219
    %v221 = vlaneseq
    %v222 = vshrl.u32 %v221, 7
    %v223 = vsub.s32 2, %v222
    %v224 = vrot.slane %v215, %v223
    %v225 = vlaneseq
    %v226 = vshrl.u32 %v225, 7
    %v227 = vsub.s32 4, %v226
    %v228 = vrot.slane %v215, %v227
    %v229 = vlaneseq
    %v230 = vshrl.u32 %v229, 7
    %v231 = vsub.s32 6, %v230
    %v232 = vrot.slane %v215, %v231
    %v237 = vlaneseq
    %v238 = vshrl.u32 %v237, 7
    %v239 = vsub.s32 0, %v238
    %v240 = vrot.slane %v220, %v239
    %v241 = vlaneseq
    %v242 = vshrl.u32 %v241, 7
    %v243 = vsub.s32 0, %v242
    %v244 = vrot.slane %v224, %v243
    %v245 = vlaneseq
    %v246 = vshrl.u32 %v245, 7
    %v247 = vsub.s32 0, %v246
    %v248 = vrot.slane %v228, %v247
    %v249 = vlaneseq
    %v250 = vshrl.u32 %v249, 7
    %v251 = vsub.s32 0, %v250
    %v252 = vrot.slane %v232, %v251
    %v285 = vunpack.c.l.b16 %v182
    %v286 = vunpack.c.h.b16 %v182
    %v287 = vunpack.c.l.b16 %v183
    %v288 = vunpack.c.h.b16 %v183
    %v289 = vunpack.c.l.b16 %v184
    %v290 = vunpack.c.h.b16 %v184
    %v291 = vunpack.c.l.b16 %v185
    %v292 = vunpack.c.h.b16 %v185
    %v293 = vunpack.c.l.b16 %v186
    %v294 = vunpack.c.h.b16 %v186
    %v295 = vunpack.c.l.b16 %v187
    %v296 = vunpack.c.h.b16 %v187
    %v297 = vunpack.c.l.b16 %v188
    %v298 = vunpack.c.h.b16 %v188
    %v299 = vunpack.c.l.b16 %v189
    %v300 = vunpack.c.h.b16 %v189
    %v301 = vunpack.c.l.b16 %v190
    %v302 = vunpack.c.h.b16 %v190
    %v303 = vunpack.c.l.b16 %v191
    %v304 = vunpack.c.h.b16 %v191
    %v305 = vunpack.c.l.b16 %v192
    %v306 = vunpack.c.h.b16 %v192
    %v307 = vunpack.c.l.b16 %v193
    %v308 = vunpack.c.h.b16 %v193
    %v309 = vunpack.c.l.b16 %v194
    %v310 = vunpack.c.h.b16 %v194
    %v311 = vunpack.c.l.b16 %v195
    %v312 = vunpack.c.h.b16 %v195
    %v313 = vunpack.c.l.b16 %v196
    %v314 = vunpack.c.h.b16 %v196
    %v315 = vunpack.c.l.b16 %v197
    %v316 = vunpack.c.h.b16 %v197
    %v317 = vunpack.c.l.b16 %v198
    %v318 = vunpack.c.h.b16 %v198
    %v319 = vunpack.c.l.b16 %v199
    %v320 = vunpack.c.h.b16 %v199
    %v321 = vunpack.c.l.b16 %v200
    %v322 = vunpack.c.h.b16 %v200
    %v323 = vunpack.c.l.b16 %v201
    %v324 = vunpack.c.h.b16 %v201
    %v325 = vunpack.c.l.b16 %v202
    %v326 = vunpack.c.h.b16 %v202
    %v327 = vunpack.c.l.b16 %v203
    %v328 = vunpack.c.h.b16 %v203
    %v329 = vunpack.c.l.b16 %v204
    %v330 = vunpack.c.h.b16 %v204
    %v331 = vunpack.c.l.b16 %v205
    %v332 = vunpack.c.h.b16 %v205
    %v333 = vunpack.c.l.b16 %v206
    %v334 = vunpack.c.h.b16 %v206
    %v335 = vunpack.c.l.b16 %v207
    %v336 = vunpack.c.h.b16 %v207
    %v337 = vunpack.c.l.b16 %v208
    %v338 = vunpack.c.h.b16 %v208
    %v339 = vunpack.c.l.b16 %v209
    %v340 = vunpack.c.h.b16 %v209
    %v341 = vunpack.c.l.b16 %v210
    %v342 = vunpack.c.h.b16 %v210
    %v343 = vunpack.c.l.b16 %v211
    %v344 = vunpack.c.h.b16 %v211
    %v345 = vunpack.c.l.b16 %v212
    %v346 = vunpack.c.h.b16 %v212
    %v347 = vunpack.c.l.b16 %v213
    %v348 = vunpack.c.h.b16 %v213
    %v349 = vpack.c.b16 %v289, %v285
    %v350 = vpack.c.b16 %v290, %v286
    %v351 = vpack.c.b16 %v291, %v287
    %v352 = vpack.c.b16 %v292, %v288
    %v353 = vpack.c.b16 %v297, %v293
    %v354 = vpack.c.b16 %v298, %v294
    %v355 = vpack.c.b16 %v299, %v295
    %v356 = vpack.c.b16 %v300, %v296
    %v357 = vpack.c.b16 %v305, %v301
    %v358 = vpack.c.b16 %v306, %v302
    %v359 = vpack.c.b16 %v307, %v303
    %v360 = vpack.c.b16 %v308, %v304
    %v361 = vpack.c.b16 %v313, %v309
    %v362 = vpack.c.b16 %v314, %v310
    %v363 = vpack.c.b16 %v315, %v311
    %v364 = vpack.c.b16 %v316, %v312
    %v365 = vpack.c.b16 %v321, %v317
    %v366 = vpack.c.b16 %v322, %v318
    %v367 = vpack.c.b16 %v323, %v319
    %v368 = vpack.c.b16 %v324, %v320
    %v369 = vpack.c.b16 %v329, %v325
    %v370 = vpack.c.b16 %v330, %v326
    %v371 = vpack.c.b16 %v331, %v327
    %v372 = vpack.c.b16 %v332, %v328
    %v373 = vpack.c.b16 %v337, %v333
    %v374 = vpack.c.b16 %v338, %v334
    %v375 = vpack.c.b16 %v339, %v335
    %v376 = vpack.c.b16 %v340, %v336
    %v377 = vpack.c.b16 %v345, %v341
    %v378 = vpack.c.b16 %v346, %v342
    %v379 = vpack.c.b16 %v347, %v343
    %v380 = vpack.c.b16 %v348, %v344
    %413 = vmatprep.subr.bf16.mxu0 %v350
    %414 = vmatpush1.bf16.msra.mxu0 %v349
    %415 = vmatprep.subr.bf16.mxu0 %v354
    %416 = vmatpush1.bf16.msra.mxu0 %v353
    %417 = vmatprep.subr.bf16.mxu0 %v358
    %418 = vmatpush1.bf16.msra.mxu0 %v357
    %419 = vmatprep.subr.bf16.mxu0 %v362
    %420 = vmatpush1.bf16.msra.mxu0 %v361
    %421 = vmatprep.subr.bf16.mxu0 %v366
    %422 = vmatpush1.bf16.msra.mxu0 %v365
    %423 = vmatprep.subr.bf16.mxu0 %v370
    %424 = vmatpush1.bf16.msra.mxu0 %v369
    %425 = vmatprep.subr.bf16.mxu0 %v374
    %426 = vmatpush1.bf16.msra.mxu0 %v373
    %427 = vmatprep.subr.bf16.mxu0 %v378
    %428 = vmatpush1.bf16.msra.mxu0 %v377
    %429 = vmatprep.subr.bf16.mxu0 0
    %430 = vmatpush1.bf16.msra.mxu0 0
    %431 = vmatprep.subr.bf16.mxu0 0
    %432 = vmatpush1.bf16.msra.mxu0 0
    %433 = vmatprep.subr.bf16.mxu0 0
    %434 = vmatpush1.bf16.msra.mxu0 0
    %435 = vmatprep.subr.bf16.mxu0 0
    %436 = vmatpush1.bf16.msra.mxu0 0
    %437 = vmatprep.subr.bf16.mxu0 0
    %438 = vmatpush1.bf16.msra.mxu0 0
    %439 = vmatprep.subr.bf16.mxu0 0
    %440 = vmatpush1.bf16.msra.mxu0 0
    %441 = vmatprep.subr.bf16.mxu0 0
    %442 = vmatpush1.bf16.msra.mxu0 0
    %443 = vmatprep.subr.bf16.mxu0 0
    %444 = vmatpush1.bf16.msra.mxu0 0
    %445 = vmatprep.mubr.bf16.mxu0 0
    %446 = vmatmul.mubr.bf16.gmra.mrb[0].mxu0 %v181
    %v447 = vpop.f32.mrb[0].mxu0
    %v448 = vadd.f32 %v240, %v447
    %v449 = vpop.f32.mrb[0].mxu0
    %v450 = vadd.f32 %v244, %v449
    %v451 = vpop.f32.mrb[0].mxu0
    %v452 = vpop.f32.mrb[0].mxu0
    %453 = vdwg.mxu0
    %454 = vmatprep.subr.bf16.mxu0 %v352
    %455 = vmatpush1.bf16.msra.mxu0 %v351
    %456 = vmatprep.subr.bf16.mxu0 %v356
    %457 = vmatpush1.bf16.msra.mxu0 %v355
    %458 = vmatprep.subr.bf16.mxu0 %v360
    %459 = vmatpush1.bf16.msra.mxu0 %v359
    %460 = vmatprep.subr.bf16.mxu0 %v364
    %461 = vmatpush1.bf16.msra.mxu0 %v363
    %462 = vmatprep.subr.bf16.mxu0 %v368
    %463 = vmatpush1.bf16.msra.mxu0 %v367
    %464 = vmatprep.subr.bf16.mxu0 %v372
    %465 = vmatpush1.bf16.msra.mxu0 %v371
    %466 = vmatprep.subr.bf16.mxu0 %v376
    %467 = vmatpush1.bf16.msra.mxu0 %v375
    %468 = vmatprep.subr.bf16.mxu0 %v380
    %469 = vmatpush1.bf16.msra.mxu0 %v379
    %470 = vmatprep.subr.bf16.mxu0 0
    %471 = vmatpush1.bf16.msra.mxu0 0
    %472 = vmatprep.subr.bf16.mxu0 0
    %473 = vmatpush1.bf16.msra.mxu0 0
    %474 = vmatprep.subr.bf16.mxu0 0
    %475 = vmatpush1.bf16.msra.mxu0 0
    %476 = vmatprep.subr.bf16.mxu0 0
    %477 = vmatpush1.bf16.msra.mxu0 0
    %478 = vmatprep.subr.bf16.mxu0 0
    %479 = vmatpush1.bf16.msra.mxu0 0
    %480 = vmatprep.subr.bf16.mxu0 0
    %481 = vmatpush1.bf16.msra.mxu0 0
    %482 = vmatprep.subr.bf16.mxu0 0
    %483 = vmatpush1.bf16.msra.mxu0 0
    %484 = vmatprep.subr.bf16.mxu0 0
    %485 = vmatpush1.bf16.msra.mxu0 0
    %486 = vmatprep.mubr.bf16.mxu0 0
    %487 = vmatmul.mubr.bf16.gmra.mrb[0].mxu0 %v181
    %v488 = vpop.f32.mrb[0].mxu0
    %v489 = vadd.f32 %v248, %v488
    %v490 = vpop.f32.mrb[0].mxu0
    %v491 = vadd.f32 %v252, %v490
    %v492 = vpop.f32.mrb[0].mxu0
    %v493 = vpop.f32.mrb[0].mxu0
    %494 = vdwg.mxu0
    %495 = vst [vmem:[#allocation9] sm:$0xff] %v448
    %496 = vst [vmem:[#allocation9 + $0x8] sm:$0xff] %v450
    %497 = vst [vmem:[#allocation9 + $0x10] sm:$0xff] %v489
    %498 = vst [vmem:[#allocation9 + $0x18] sm:$0xff] %v491
    // Predicated region
    $region50: #{tpu_custom_call.1} parent=1 // pred_check
      _
    $region51: #{tpu_custom_call.1} parent=1 // pred_check_branch
      %500 = sbr.rel (0) target = $region53
    $region52: #{tpu_custom_call.1} parent=1 // pred_region
      %s502 = ssub.s32 512, 512
      %503 = vsyncadd [#allocation8], %s502
      %s505 = sshll.u32 [#allocation9], 4
      %s506 = int_to_ptr.vmem [resolvable:$true] %s505
      %508 = dma.vmem_to_hbm [thread:$0]  %s506, 512, %s4, [#allocation8]
    $region53: #{tpu_custom_call.1} parent=1 // pred_fallthru
      _
    // Predicated region
    $region54: #{tpu_custom_call.1} parent=1 // pred_check
      _
    $region55: #{tpu_custom_call.1} parent=1 // pred_check_branch
      %510 = sbr.rel (0) target = $region57
    $region56: #{tpu_custom_call.1} parent=1 // pred_region
      %511 = dma.done [#allocation8], 512
    $region57: #{tpu_custom_call.1} parent=1 // pred_fallthru
      _
    %512 = vsyncpa [#allocation7], 1
    %513 = vsyncpa [#allocation8], 1
  %514 = vsyncmov [#allocation3]
  %s515 = vpop.sfrf %514
  %p516 = scmp.eq.s32.totalorder %s515, 0
  %p517 = pneg %p516
  %519 = shalt.err (%p517)
  %s520 = scalar_lea.sflag [#allocation3], 1
  %521 = vsyncmov %s520
  %s522 = vpop.sfrf %521
  %p523 = scmp.eq.s32.totalorder %s522, 0
  %p524 = pneg %p523
  %526 = shalt.err (%p524)
  %s527 = scalar_lea.sflag [#allocation3], 2
  %528 = vsyncmov %s527
  %s529 = vpop.sfrf %528
  %p530 = scmp.eq.s32.totalorder %s529, 0
  %p531 = pneg %p530
  %533 = shalt.err (%p531)
  %s534 = scalar_lea.sflag [#allocation3], 3
  %535 = vsyncmov %s534
  %s536 = vpop.sfrf %535
  %p537 = scmp.eq.s32.totalorder %s536, 0
  %p538 = pneg %p537
  %540 = shalt.err (%p538)
  %s541 = scalar_lea.sflag [#allocation3], 4
  %542 = vsyncmov %s541
  %s543 = vpop.sfrf %542
  %p544 = scmp.eq.s32.totalorder %s543, 0
  %p545 = pneg %p544
  %547 = shalt.err (%p545)
  %s548 = scalar_lea.sflag [#allocation3], 5
  %549 = vsyncmov %s548
  %s550 = vpop.sfrf %549
  %p551 = scmp.eq.s32.totalorder %s550, 0
  %p552 = pneg %p551
  %554 = shalt.err (%p552)
  %s555 = scalar_lea.sflag [#allocation3], 6
  %556 = vsyncmov %s555
  %s557 = vpop.sfrf %556
  %p558 = scmp.eq.s32.totalorder %s557, 0
  %p559 = pneg %p558
  %561 = shalt.err (%p559)
  %s562 = scalar_lea.sflag [#allocation3], 7
  %563 = vsyncmov %s562
  %s564 = vpop.sfrf %563
  %p565 = scmp.eq.s32.totalorder %s564, 0
  %p566 = pneg %p565
  %568 = shalt.err (%p566)

</llo_original>
